<compile_context>
chip_gen: v5e
topology: v5e:2x2
jax: 0.10.0
libtpu: 0.0.40
codegen_flags: <defaults>
</compile_context>

<pallas_src>
import functools

import jax
import jax.numpy as jnp
from jax.experimental import pallas as pl
from jax.experimental.pallas import tpu as pltpu

_LANE = 128  # lane width (last-dim tiling unit)


def _sublane(dtype):
    """Native sublane packing: 8 rows for 4-byte, 16 for 2-byte, 32 for 1-byte."""
    return max(8, 32 // jnp.dtype(dtype).itemsize)


def _noise_inj_kernel(w_ref, x_ref, noise_ref, o_ref, *, tc):
    # w_ref:     (C, 1)       whole per-channel scale, VMEM-resident
    # x_ref:     (1, TC, TS)  activation tile
    # noise_ref: (1, 1, TS)   noise tile (shared across the channel-block axis)
    # o_ref:     (1, TC, TS)  output tile
    c_start = pl.multiple_of(pl.program_id(2) * tc, tc)
    w = w_ref[pl.ds(c_start, tc), :].astype(jnp.float32)[None, :, :]   # (1, TC, 1)
    x = x_ref[...].astype(jnp.float32)                                 # (1, TC, TS)
    nz = noise_ref[...].astype(jnp.float32)                            # (1, 1, TS)
    o_ref[...] = (x + nz * w).astype(o_ref.dtype)


def _vmem_budget():
    """Generation-aware (target slab bytes, scoped vmem limit)."""
    cap = None
    try:
        cap = getattr(pltpu.get_tpu_info(), "vmem_capacity_bytes", None)
    except Exception:
        cap = None
    if not isinstance(cap, int) or cap <= 0:
        cap = 64 * 1024 * 1024                 # conservative: v7x per-TC VMEM
    vmem_limit = min((cap * 3) // 4, 96 * 1024 * 1024)
    # x + out are double-buffered (~4x target) plus the noise stream; keep the
    # total comfortably under the scoped limit.
    target = min(max(2 * 1024 * 1024, vmem_limit // 10), 8 * 1024 * 1024)
    return target, vmem_limit


def _divisor_tiles(dim, unit):
    """Legal tile sizes for `dim`: divisors that are multiples of `unit`,
    plus the full dim itself (always legal)."""
    tiles = {dim}
    for t in range(unit, dim + 1, unit):
        if dim % t == 0:
            tiles.add(t)
    return sorted(tiles)


def _pick_tiles(N, C, S, itemsize, sublane, target_bytes):
    """Choose (TC, TS): lane-dense, <= ~target_bytes, and >= 2 grid steps
    when the tensor allows it (v7x megacore occupancy)."""
    tc_opts = _divisor_tiles(C, sublane)
    ts_opts = _divisor_tiles(S, _LANE)
    tc_min = tc_opts[0]
    ts_fit = [t for t in ts_opts if tc_min * t * itemsize <= target_bytes]
    ts = max(ts_fit) if ts_fit else ts_opts[0]
    tc_fit = [c for c in tc_opts if c * ts * itemsize <= target_bytes]
    tc = max(tc_fit) if tc_fit else tc_min
    if N * (S // ts) * (C // tc) < 2:
        smaller_ts = [t for t in ts_opts if t < ts]
        smaller_tc = [c for c in tc_opts if c < tc]
        if smaller_ts:
            ts = max(smaller_ts)
        elif smaller_tc:
            tc = max(smaller_tc)
    return tc, ts


def noise_injection(x, noise, weight, *, donate_x=False):
    """x: (N, C, H, W), noise: (N, 1, H, W), weight: (1, C, 1, 1)."""
    N, C, H, W = x.shape
    assert noise.shape == (N, 1, H, W)
    assert weight.shape == (1, C, 1, 1)

    S = H * W

    # Tiny early StyleGAN stages (4x4 / 8x8): lane dim would be masked and
    # per-call overhead dominates -> fused XLA elementwise op instead.
    if S < _LANE:
        out = (x.astype(jnp.float32)
               + noise.astype(jnp.float32) * weight.astype(jnp.float32))
        return out.astype(x.dtype)

    itemsize = jnp.dtype(x.dtype).itemsize
    sublane = _sublane(x.dtype)
    target_bytes, vmem_limit = _vmem_budget()

    # Lane-dense layout: flatten (H, W) -> S (free, contiguous reshape).
    x3 = x.reshape(N, C, S)
    n3 = noise.reshape(N, 1, S)
    w2 = weight.reshape(C, 1)            # parameter dtype; f32 math in-kernel

    # Pad S up to a multiple of 128 so the spatial axis can always be split
    # into lane-dense tiles (bounded blocks, unmasked stores).
    S_pad = ((S + _LANE - 1) // _LANE) * _LANE
    if S_pad != S:
        pad = S_pad - S
        x3 = jnp.pad(x3, ((0, 0), (0, 0), (0, pad)))
        n3 = jnp.pad(n3, ((0, 0), (0, 0), (0, pad)))

    tc, ts = _pick_tiles(N, C, S_pad, itemsize, sublane, target_bytes)

    # Channel-block axis innermost: noise block index is constant along it,
    # so its DMA is skipped between consecutive channel blocks.
    grid = (N, S_pad // ts, C // tc)

    kernel = functools.partial(_noise_inj_kernel, tc=tc)

    out3 = pl.pallas_call(
        kernel,
        out_shape=jax.ShapeDtypeStruct((N, C, S_pad), x.dtype),
        grid_spec=pltpu.PrefetchScalarGridSpec(
            num_scalar_prefetch=0,
            grid=grid,
            in_specs=[
                # whole weight, VMEM-resident for the entire call (one DMA)
                pl.BlockSpec((C, 1), lambda n, s, c: (0, 0)),
                # activation slab
                pl.BlockSpec((1, tc, ts), lambda n, s, c: (n, c, s)),
                # noise slab (channel axis size 1 -> always block 0)
                pl.BlockSpec((1, 1, ts), lambda n, s, c: (n, 0, s)),
            ],
            out_specs=pl.BlockSpec((1, tc, ts), lambda n, s, c: (n, c, s)),
        ),
        compiler_params=pltpu.CompilerParams(
            # no cross-step dependence anywhere -> all parallel; on v7x this
            # lets the 2 TensorCores split any axis with extent >= 2.
            dimension_semantics=("parallel", "parallel", "parallel"),
            vmem_limit_bytes=vmem_limit,
        ),
        input_output_aliases=({1: 0} if donate_x else {}),
    )(w2, x3, n3)

    if S_pad != S:
        out3 = out3[:, :, :S]
    return out3.reshape(N, C, H, W)


if __name__ == "__main__":
    key = jax.random.PRNGKey(0)
    kx, kn, kw = jax.random.split(key, 3)

    N, C, H, W = 2, 4, 16, 16
    x = jax.random.normal(kx, (N, C, H, W), dtype=jnp.float32)
    noise = jax.random.normal(kn, (N, 1, H, W), dtype=jnp.float32)
    # deterministic init mirroring nn.Parameter(torch.randn((1, channel, 1, 1)))
    weight = jax.random.normal(kw, (1, C, 1, 1), dtype=jnp.float32)

    out = jax.block_until_ready(noise_injection(x, noise, weight))

    # reference (same broadcasting as the PyTorch forward)
    ref = x + noise * weight
    assert out.shape == (N, C, H, W)
    assert jnp.allclose(out, ref, atol=1e-6, rtol=1e-6)

    print("KERNEL_OK")
</pallas_src>

<mosaic_0001>
module attributes {stable_mosaic.version = 11 : i64} {
  func.func @_noise_inj_kernel(%arg0: i32, %arg1: i32, %arg2: i32, %arg3: memref<4x1xf32, #tpu.memory_space<vmem>>, %arg4: memref<1x4x256xf32, #tpu.memory_space<vmem>>, %arg5: memref<1x1x256xf32, #tpu.memory_space<vmem>>, %arg6: memref<1x4x256xf32, #tpu.memory_space<vmem>>) attributes {dimension_semantics = [#tpu.dimension_semantics<parallel>, #tpu.dimension_semantics<parallel>, #tpu.dimension_semantics<parallel>], iteration_bounds = array<i64: 2, 1, 1>, scalar_prefetch = 0 : i64, scratch_operands = 0 : i64, tpu.core_type = #tpu.core_type<tc>, window_params = [{pipeline_mode = #tpu.pipeline_mode<synchronous>, transform_indices = @transform_0, window_bounds = array<i64: 4, 1>}, {transform_indices = @transform_1, window_bounds = array<i64: 1, 4, 256>}, {transform_indices = @transform_2, window_bounds = array<i64: 1, 1, 256>}, {transform_indices = @transform_3, window_bounds = array<i64: 1, 4, 256>}]} {
    %c4_i32 = arith.constant 4 : i32
    %0 = arith.muli %arg2, %c4_i32 : i32
    %1 = tpu.assume_multiple %0, 4 : i32
    %2 = arith.index_cast %1 : i32 to index
    %c0 = arith.constant 0 : index
    %3 = vector.load %arg3[%2, %c0] : memref<4x1xf32, #tpu.memory_space<vmem>>, vector<4x1xf32>
    %4 = vector.shape_cast %3 : vector<4x1xf32> to vector<1x4x1xf32>
    %c0_0 = arith.constant 0 : index
    %c0_1 = arith.constant 0 : index
    %c0_2 = arith.constant 0 : index
    %5 = vector.load %arg4[%c0_0, %c0_1, %c0_2] : memref<1x4x256xf32, #tpu.memory_space<vmem>>, vector<1x4x256xf32>
    %c0_3 = arith.constant 0 : index
    %c0_4 = arith.constant 0 : index
    %c0_5 = arith.constant 0 : index
    %6 = vector.load %arg5[%c0_3, %c0_4, %c0_5] : memref<1x1x256xf32, #tpu.memory_space<vmem>>, vector<1x1x256xf32>
    %7 = vector.broadcast %6 : vector<1x1x256xf32> to vector<1x4x256xf32>
    %8 = vector.broadcast %4 : vector<1x4x1xf32> to vector<1x4x256xf32>
    %9 = arith.mulf %7, %8 : vector<1x4x256xf32>
    %10 = arith.addf %5, %9 : vector<1x4x256xf32>
    %c0_6 = arith.constant 0 : index
    %c0_7 = arith.constant 0 : index
    %c0_8 = arith.constant 0 : index
    %11 = vector.load %arg6[%c0_6, %c0_7, %c0_8] : memref<1x4x256xf32, #tpu.memory_space<vmem>>, vector<1x4x256xf32>
    tpu.vector_store %arg6[%c0_6, %c0_7, %c0_8], %10 {strides = array<i32>} : memref<1x4x256xf32, #tpu.memory_space<vmem>>, vector<1x4x256xf32>,
    return
  }
  func.func @transform_0(%arg0: i32, %arg1: i32, %arg2: i32) -> (i32, i32) {
    %c0_i32 = arith.constant 0 : i32
    %c0_i32_0 = arith.constant 0 : i32
    %c0_i32_1 = arith.constant 0 : i32
    return %c0_i32, %c0_i32_0 : i32, i32
  }
  func.func @transform_1(%arg0: i32, %arg1: i32, %arg2: i32) -> (i32, i32, i32) {
    %c0_i32 = arith.constant 0 : i32
    return %arg0, %arg2, %arg1 : i32, i32, i32
  }
  func.func @transform_2(%arg0: i32, %arg1: i32, %arg2: i32) -> (i32, i32, i32) {
    %c0_i32 = arith.constant 0 : i32
    %c0_i32_0 = arith.constant 0 : i32
    return %arg0, %c0_i32, %arg1 : i32, i32, i32
  }
  func.func @transform_3(%arg0: i32, %arg1: i32, %arg2: i32) -> (i32, i32, i32) {
    %c0_i32 = arith.constant 0 : i32
    return %arg0, %arg2, %arg1 : i32, i32, i32
  }
}

</mosaic_0001>

<llo_original>
// kernel: tpu_custom_call.1
$region0: #{tpu_custom_call.1}
  #allocation0 [shape = 'u32[]', space=smem, size = 0x4, offset = 0x4, fixed_abs, tag = 'smem constant byte address 0x4 - core index']
  #allocation1 [shape = 'u32[72,128]{1,0:T(1,128)}', space=vmem, size = 0x9000, scoped, tag = 'internal scratch']
  %s0 = inlined_call_operand.vmem [shape: f32[4,1], index: 0, kind: input, shape index: {}]
  %s1 = inlined_call_operand.hbm [shape: f32[2,4,256], index: 1, kind: input, shape index: {}]
  %s2 = inlined_call_operand.vmem [shape: f32[2,1,256], index: 2, kind: input, shape index: {}]
  %s3 = inlined_call_operand.hbm [shape: f32[2,4,256], index: 3, kind: output, shape index: {}]
  %s4 = sld [smem:[#allocation0]]
  $region49: #{tpu_custom_call.1} parent=0
    _
  %s6 = ssub.s32 1, %s4
  %s7 = scalar_select 0, %s6, %s4
  $region1: #{tpu_custom_call.1} parent=0
    #allocation2 [shape = 'u8[8192]{0}', space=vmem, size = 0x2000, scoped, tag = 'input window, operand 1']
    #allocation3 [shape = 's32[2]{0}', space=sflag, size = 0x8, scoped, tag = 'scoped memory for tpu_custom_call.1']
    #allocation4 [shape = 's32[2]{0}', space=sflag, size = 0x8, scoped, tag = 'scoped memory for tpu_custom_call.1']
    #allocation5 [shape = 'u8[8192]{0}', space=vmem, size = 0x2000, scoped, tag = 'output window, operand 0']
    %8 = vsyncpa [#allocation3], 0
    %s9 = scalar_lea.sflag [#allocation3], 1
    %10 = vsyncpa %s9, 0
    %11 = vsyncpa [#allocation4], 0
    %s12 = scalar_lea.sflag [#allocation4], 1
    %13 = vsyncpa %s12, 0
    loop: start=0, step=1, limit=4
    $region2: #{tpu_custom_call.1} parent=1 // loop_pre_header
      _
    $region3: #{tpu_custom_call.1} parent=1 // loop_header
      %s15 = sphi 0, %s19
      %p16 = scmp.ge.s32.totalorder %s15, 4
      %s22 = sphi 0, %s41
      %s23 = sphi 0, %s37
      %s24 = sphi 0, %s33
      %s25 = sphi 0, %s22
      %s26 = sphi 0, %s23
      %s27 = sphi 0, %s24
      %s28 = sphi 0, %s25
      %s29 = sphi 0, %s26
      %s30 = sphi 0, %s27
      %s42 = sphi 0, %s42
      %s44 = sphi 0, %s42
      %s45 = sphi 0, %s44
      %s59 = sphi 0, %s45
      %s69 = sphi 0, %s71
      %s72 = sphi 0, %s69
      %s73 = sphi 0, %s72
      %s89 = sphi 0, %s73
      %s97 = sphi 0, %s99
      %s100 = sphi 0, %s97
      %s101 = sphi 0, %s100
      %s117 = sphi 0, %s101
      %s127 = sphi 0, %s129
      %s130 = sphi 0, %s127
      %s131 = sphi 0, %s130
      %s147 = sphi 0, %s131
    $region4: #{tpu_custom_call.1} parent=1 // loop_header_branch
      %18 = sbr.rel (%p16) target = $region8
    $region5: #{tpu_custom_call.1} parent=1 // loop_body
      %s20 = ssub.s32 %s15, 1
      %s21 = ssub.s32 %s15, 2
      %s31 = sadd.s32 1, %s24
      %p32 = scmp.ge.s32.totalorder %s31, 1
      %s33 = scalar_select %p32, 0, %s31
      %s34 = sadd.s32 1, %s23
      %s35 = scalar_select %p32, %s34, %s23
      %p36 = scmp.ge.s32.totalorder %s35, 1
      %s37 = scalar_select %p36, 0, %s35
      %s38 = sadd.s32 1, %s22
      %s39 = scalar_select %p36, %s38, %s22
      %p40 = scmp.ge.s32.totalorder %s39, 2
      %s41 = scalar_select %p40, 0, %s39
      %s43 = sadd.s32 %s42, 1
      %p46 = scmp.eq.s32.totalorder %s15, 1
      %p47 = scmp.ne.s32.totalorder %s42, %s44
      %p48 = scmp.eq.s32.totalorder %s15, 0
      %p49 = por %p47, %p48
      %p50 = scmp.ne.s32.totalorder %s42, %s44
      %p51 = scmp.eq.s32.totalorder %s20, 1
      %p52 = por %p50, %p51
      %p53 = scmp.ne.s32.totalorder %s44, %s45
      %p54 = scmp.eq.s32.totalorder %s20, 0
      %p55 = por %p53, %p54
      %p56 = scmp.ne.s32.totalorder %s44, %s45
      %p57 = scmp.eq.s32.totalorder %s21, 1
      %p58 = por %p56, %p57
      %p60 = scmp.ne.s32.totalorder %s45, %s59
      %p61 = scmp.eq.s32.totalorder %s21, 0
      %p62 = por %p60, %p61
      %s63 = ssub.s32 %s22, %s41
      %s64 = ssub.s32 %s24, %s33
      %s65 = sor.u32 %s63, %s64
      %s66 = ssub.s32 %s23, %s37
      %s67 = sor.u32 %s65, %s66
      %p68 = scmp.eq.s32.totalorder %s67, 0
      %s70 = sadd.s32 %s69, 1
      %s71 = scalar_select %p68, %s69, %s70
      %p74 = pneg %p68
      %p75 = scmp.eq.s32.totalorder %s15, 1
      %p76 = por %p74, %p75
      %p77 = scmp.ne.s32.totalorder %s69, %s72
      %p78 = scmp.eq.s32.totalorder %s15, 0
      %p79 = por %p77, %p78
      %p80 = scmp.ne.s32.totalorder %s69, %s72
      %p81 = scmp.eq.s32.totalorder %s20, 1
      %p82 = por %p80, %p81
      %p83 = scmp.ne.s32.totalorder %s72, %s73
      %p84 = scmp.eq.s32.totalorder %s20, 0
      %p85 = por %p83, %p84
      %p86 = scmp.ne.s32.totalorder %s72, %s73
      %p87 = scmp.eq.s32.totalorder %s21, 1
      %p88 = por %p86, %p87
      %p90 = scmp.ne.s32.totalorder %s73, %s89
      %p91 = scmp.eq.s32.totalorder %s21, 0
      %p92 = por %p90, %p91
      %s93 = ssub.s32 %s22, %s41
      %s94 = ssub.s32 %s23, %s37
      %s95 = sor.u32 %s93, %s94
      %p96 = scmp.eq.s32.totalorder %s95, 0
      %s98 = sadd.s32 %s97, 1
      %s99 = scalar_select %p96, %s97, %s98
      %p102 = pneg %p96
      %p103 = scmp.eq.s32.totalorder %s15, 1
      %p104 = por %p102, %p103
      %p105 = scmp.ne.s32.totalorder %s97, %s100
      %p106 = scmp.eq.s32.totalorder %s15, 0
      %p107 = por %p105, %p106
      %p108 = scmp.ne.s32.totalorder %s97, %s100
      %p109 = scmp.eq.s32.totalorder %s20, 1
      %p110 = por %p108, %p109
      %p111 = scmp.ne.s32.totalorder %s100, %s101
      %p112 = scmp.eq.s32.totalorder %s20, 0
      %p113 = por %p111, %p112
      %p114 = scmp.ne.s32.totalorder %s100, %s101
      %p115 = scmp.eq.s32.totalorder %s21, 1
      %p116 = por %p114, %p115
      %p118 = scmp.ne.s32.totalorder %s101, %s117
      %p119 = scmp.eq.s32.totalorder %s21, 0
      %p120 = por %p118, %p119
      %s121 = ssub.s32 %s22, %s41
      %s122 = ssub.s32 %s24, %s33
      %s123 = sor.u32 %s121, %s122
      %s124 = ssub.s32 %s23, %s37
      %s125 = sor.u32 %s123, %s124
      %p126 = scmp.eq.s32.totalorder %s125, 0
      %s128 = sadd.s32 %s127, 1
      %s129 = scalar_select %p126, %s127, %s128
      %p132 = pneg %p126
      %p133 = scmp.eq.s32.totalorder %s15, 1
      %p134 = por %p132, %p133
      %p135 = scmp.ne.s32.totalorder %s127, %s130
      %p136 = scmp.eq.s32.totalorder %s15, 0
      %p137 = por %p135, %p136
      %p138 = scmp.ne.s32.totalorder %s127, %s130
      %p139 = scmp.eq.s32.totalorder %s20, 1
      %p140 = por %p138, %p139
      %p141 = scmp.ne.s32.totalorder %s130, %s131
      %p142 = scmp.eq.s32.totalorder %s20, 0
      %p143 = por %p141, %p142
      %p144 = scmp.ne.s32.totalorder %s130, %s131
      %p145 = scmp.eq.s32.totalorder %s21, 1
      %p146 = por %p144, %p145
      %p148 = scmp.ne.s32.totalorder %s131, %s147
      %p149 = scmp.eq.s32.totalorder %s21, 0
      %p150 = por %p148, %p149
      %p151 = scmp.le.s32.totalorder 1, %s15
      %p152 = scmp.lt.s32.totalorder %s15, 3
      %p153 = pnand %p151, %p152
      %p154 = pneg %p153
      // Predicated region
      $region9: #{tpu_custom_call.1} parent=5 // pred_check
        _
      $region10: #{tpu_custom_call.1} parent=5 // pred_check_branch
        %156 = sbr.rel (%p153) target = $region12
      $region11: #{tpu_custom_call.1} parent=5 // pred_region
        %s157 = ssub.s32 %s15, 1
        // Predicated region
        $region13: #{tpu_custom_call.1} parent=11 // pred_check
          %p158 = pneg %p55
        $region14: #{tpu_custom_call.1} parent=11 // pred_check_branch
          %160 = sbr.rel (%p158) target = $region16
        $region15: #{tpu_custom_call.1} parent=11 // pred_region
          _
        $region16: #{tpu_custom_call.1} parent=11 // pred_fallthru
          _
      $region12: #{tpu_custom_call.1} parent=5 // pred_fallthru
        _
      %p161 = scmp.lt.s32.totalorder %s15, 2
      // Predicated region
      $region17: #{tpu_custom_call.1} parent=5 // pred_check
        %p162 = pneg %p161
      $region18: #{tpu_custom_call.1} parent=5 // pred_check_branch
        %164 = sbr.rel (%p162) target = $region20
      $region19: #{tpu_custom_call.1} parent=5 // pred_region
        // Predicated region
        $region21: #{tpu_custom_call.1} parent=19 // pred_check
          %p165 = pneg %p79
        $region22: #{tpu_custom_call.1} parent=19 // pred_check_branch
          %167 = sbr.rel (%p165) target = $region24
        $region23: #{tpu_custom_call.1} parent=19 // pred_region
          %s168 = sand.u32 %s69, 1
          %s169 = scalar_lea.sflag [#allocation3], %s168
          %s170 = sand.u32 %s69, 1
          %s171 = smul.addr %s170, 8
          %s172 = scalar_lea.vmem [#allocation2], %s171
          %s173 = smul.u32 2, %s23
          %175 = vsyncadd %s169, 0
          %s176 = smul.addr %s24, 2
          %s177 = sadd.s32 %s173, %s176
          %s178 = smul.addr %s22, 2
          %s179 = sadd.s32 %s177, %s178
          %s180 = smul.addr %s179, 4
          %s181 = scalar_lea.hbm %s1, %s180
          %s183 = sshll.u32 %s181, 4
          %s184 = int_to_ptr.hbm [resolvable:$true] %s183
          %s185 = sshll.u32 %s172, 4
          %s186 = int_to_ptr.vmem [resolvable:$true] %s185
          %188 = dma.hbm_to_vmem [thread:$0]  %s184, 128, %s186, %s169
        $region24: #{tpu_custom_call.1} parent=19 // pred_fallthru
          _
        // Predicated region
        $region25: #{tpu_custom_call.1} parent=19 // pred_check
          %p189 = pneg %p107
        $region26: #{tpu_custom_call.1} parent=19 // pred_check_branch
          %191 = sbr.rel (%p189) target = $region28
        $region27: #{tpu_custom_call.1} parent=19 // pred_region
          %s192 = smul.u32 2, %s23
          %p193 = scmp.lt.s32.totalorder %s22, 1
          %s194 = scalar_select %p193, %s22, 1
          %p195 = scmp.lt.s32.totalorder %s192, 1
          %s196 = scalar_select %p195, %s192, 1
          %s197 = smul.addr %s194, 2
          %s198 = sadd.s32 %s196, %s197
          %s199 = scalar_lea.vmem %s2, %s198
          %s200 = smul.u32 2, %s23
        $region28: #{tpu_custom_call.1} parent=19 // pred_fallthru
          _
      $region20: #{tpu_custom_call.1} parent=5 // pred_fallthru
        _
      %p201 = scmp.le.s32.totalorder 1, %s15
      %p202 = scmp.lt.s32.totalorder %s15, 3
      %p203 = pnand %p201, %p202
      %p204 = pneg %p203
      // Predicated region
      $region29: #{tpu_custom_call.1} parent=5 // pred_check
        _
      $region30: #{tpu_custom_call.1} parent=5 // pred_check_branch
        %206 = sbr.rel (%p203) target = $region32
      $region31: #{tpu_custom_call.1} parent=5 // pred_region
        %s207 = ssub.s32 %s15, 1
        %s208 = sand.u32 %s72, 1
        %s209 = scalar_lea.sflag [#allocation3], %s208
        %s210 = sand.u32 %s72, 1
        %s211 = smul.addr %s210, 8
        %s212 = scalar_lea.vmem [#allocation2], %s211
        // Predicated region
        $region33: #{tpu_custom_call.1} parent=31 // pred_check
          %p213 = pneg %p85
        $region34: #{tpu_custom_call.1} parent=31 // pred_check_branch
          %215 = sbr.rel (%p213) target = $region36
        $region35: #{tpu_custom_call.1} parent=31 // pred_region
          %217 = dma.done %s209, 128
        $region36: #{tpu_custom_call.1} parent=31 // pred_fallthru
          _
        %p218 = pneg %p55
        %p219 = pneg %p52
        %s220 = sand.u32 %s72, 1
        %s221 = scalar_lea.sflag [#allocation3], %s220
        %s222 = sand.u32 %s72, 1
        %s223 = smul.addr %s222, 8
        %s224 = scalar_lea.vmem [#allocation2], %s223
        %p225 = pneg %p85
        %p226 = pneg %p82
        %s227 = smul.u32 2, %s26
        %p228 = scmp.lt.s32.totalorder %s25, 1
        %s229 = scalar_select %p228, %s25, 1
        %p230 = scmp.lt.s32.totalorder %s227, 1
        %s231 = scalar_select %p230, %s227, 1
        %s232 = smul.addr %s229, 2
        %s233 = sadd.s32 %s231, %s232
        %s234 = scalar_lea.vmem %s2, %s233
        %p235 = pneg %p113
        %p236 = pneg %p110
        %p237 = pneg %p143
        %p238 = pneg %p140
        %s239 = sand.u32 %s130, 1
        %s240 = scalar_lea.sflag [#allocation4], %s239
        %s241 = sand.u32 %s130, 1
        %s242 = smul.addr %s241, 8
        %s243 = scalar_lea.vmem [#allocation5], %s242
        %s244 = smul.u32 2, %s26
        %s245 = smul.u32 2, %s26
        %p246 = scmp.lt.s32.totalorder %s25, 1
        %s247 = scalar_select %p246, %s25, 1
        %p248 = scmp.lt.s32.totalorder %s245, 1
        %s249 = scalar_select %p248, %s245, 1
        %s250 = smul.addr %s247, 2
        %s251 = sadd.s32 %s249, %s250
        %s252 = scalar_lea.vmem %s2, %s251
        %s253 = smul.u32 2, %s26
        %s254 = smul.u32 2, %s26
        %s255 = smul.u32 %s27, 4
        %s256 = scalar_lea.vmem %s0, %s255
        %v257 = vld [vmem:[%s256] sm:$0xf]
        %v258 = vld [vmem:[%s212] sm:$0xff]
        %v259 = vld [vmem:[%s252] sm:$0x3]
        %v261 = vperm.slane %v259, 0
        %v262 = vperm.slane %v259, 1
        %266 = vset.pattern.permute.xlu0 0
        %267 = vperm.xlu0 %266, %v257
        %v268 = vpop.permute.xlu0 %267
        %v270 = vmul.f32 %v261, %v268
        %v271 = vmul.f32 %v262, %v268
        %v274 = vrot.slane %v271, 4
        %vm275 = vcmask 1043456
        %v276 = vsel %vm275, %v270, %v274
        %v278 = vadd.f32 %v258, %v276
        %279 = vst [vmem:[%s243] sm:$0xff] %v278
        %s280 = sand.u32 %s130, 1
        %s281 = scalar_lea.sflag [#allocation4], %s280
        %s282 = sand.u32 %s130, 1
        %s283 = smul.addr %s282, 8
        %s284 = scalar_lea.vmem [#allocation5], %s283
        // Predicated region
        $region37: #{tpu_custom_call.1} parent=31 // pred_check
          %p285 = pneg %p140
        $region38: #{tpu_custom_call.1} parent=31 // pred_check_branch
          %287 = sbr.rel (%p285) target = $region40
        $region39: #{tpu_custom_call.1} parent=31 // pred_region
          %s288 = smul.u32 2, %s26
          %290 = vsyncadd %s281, 0
          %s291 = smul.addr %s27, 2
          %s292 = sadd.s32 %s288, %s291
          %s293 = smul.addr %s25, 2
          %s294 = sadd.s32 %s292, %s293
          %s295 = smul.addr %s294, 4
          %s296 = scalar_lea.hbm %s3, %s295
          %s298 = sshll.u32 %s284, 4
          %s299 = int_to_ptr.vmem [resolvable:$true] %s298
          %s300 = sshll.u32 %s296, 4
          %s301 = int_to_ptr.hbm [resolvable:$true] %s300
          %303 = dma.vmem_to_hbm [thread:$0]  %s299, 128, %s301, %s281
        $region40: #{tpu_custom_call.1} parent=31 // pred_fallthru
          _
      $region32: #{tpu_custom_call.1} parent=5 // pred_fallthru
        _
      %p304 = scmp.le.s32.totalorder 2, %s15
      // Predicated region
      $region41: #{tpu_custom_call.1} parent=5 // pred_check
        %p305 = pneg %p304
      $region42: #{tpu_custom_call.1} parent=5 // pred_check_branch
        %307 = sbr.rel (%p305) target = $region44
      $region43: #{tpu_custom_call.1} parent=5 // pred_region
        %s308 = ssub.s32 %s15, 2
        // Predicated region
        $region45: #{tpu_custom_call.1} parent=43 // pred_check
          %p309 = pneg %p146
        $region46: #{tpu_custom_call.1} parent=43 // pred_check_branch
          %311 = sbr.rel (%p309) target = $region48
        $region47: #{tpu_custom_call.1} parent=43 // pred_region
          %s312 = sand.u32 %s131, 1
          %s313 = scalar_lea.sflag [#allocation4], %s312
          %s314 = sand.u32 %s131, 1
          %s315 = smul.addr %s314, 8
          %s316 = scalar_lea.vmem [#allocation5], %s315
          %318 = dma.done %s313, 128
        $region48: #{tpu_custom_call.1} parent=43 // pred_fallthru
          _
      $region44: #{tpu_custom_call.1} parent=5 // pred_fallthru
        _
    $region6: #{tpu_custom_call.1} parent=1 // loop_footer
      %s19 = sadd.s32 1, %s15
    $region7: #{tpu_custom_call.1} parent=1 // loop_footer_branch
      %14 = sbr.rel target = $region3
    $region8: #{tpu_custom_call.1} parent=1 // loop_exit
      _
    %319 = vsyncpa [#allocation3], 1
    %s320 = scalar_lea.sflag [#allocation3], 1
    %321 = vsyncpa %s320, 1
    %322 = vsyncpa [#allocation4], 1
    %s323 = scalar_lea.sflag [#allocation4], 1
    %324 = vsyncpa %s323, 1

</llo_original>
